<compile_context>
chip_gen: v6e
topology: v6e:2x2x1
jax: 0.10.0
libtpu: 0.0.40
codegen_flags: <defaults>
</compile_context>

<pallas_src>
import functools

import jax
import jax.numpy as jnp
from jax.experimental import pallas as pl
from jax.experimental.pallas import tpu as pltpu


def _linear_clamp_kernel(x_ref, w_ref, b_ref, o_ref):
    # x_ref: (TB, IN)  w_ref: (IN, OUT)  b_ref: (1, OUT)  o_ref: (TB, OUT)
    y = jnp.dot(x_ref[...], w_ref[...], preferred_element_type=jnp.float32)
    y = y + b_ref[...]                 # broadcast bias over rows
    y = jnp.clip(y, 0.0, 2.0)          # clamp_min(., 0) then clamp_max(., 2)
    o_ref[...] = y.astype(o_ref.dtype)


def _cost(B, IN, OUT):
    return pl.CostEstimate(
        flops=2 * B * IN * OUT,
        transcendentals=0,
        bytes_accessed=4 * (B * IN + IN * OUT + OUT + B * OUT),
    )


# Whole-arrays-resident (gridless) path only for small batches: at B=2048 the
# lane-padded x + out tiles are ~2 MiB total, well inside every generation's
# scoped-VMEM default; beyond that we want the pipelined tiled path anyway.
_GRIDLESS_MAX_B = 2048


def _pick_batch_tile(B, block_b):
    """Batch tile: large (HBM-roofline friendly) but with >=~4 grid steps when
    B allows, so dual-TensorCore parts get >=2 steps per core."""
    quarter = (B // 4) // 8 * 8          # <= B//4, multiple of 8
    tb = min(block_b, max(256, quarter))
    tb = max(8, (tb // 8) * 8)           # keep the sublane constraint
    return tb


@functools.partial(jax.jit, static_argnames=("block_b",))
def linear_clamp(x, w, b, *, block_b=4096):
    """x: (B, IN) f32, w: (IN, OUT) f32, b: (OUT,) f32 -> (B, OUT) f32."""
    B, IN = x.shape
    OUT = w.shape[1]
    b2 = b.reshape(1, OUT)  # fused inside jit, not a separate XLA op per call
    out_shape = jax.ShapeDtypeStruct((B, OUT), jnp.float32)

    if B <= _GRIDLESS_MAX_B:
        # Small-batch path: single block, no grid, no pipeline bookkeeping.
        return pl.pallas_call(
            _linear_clamp_kernel,
            out_shape=out_shape,
            in_specs=[
                pl.BlockSpec(memory_space=pltpu.MemorySpace.VMEM),
                pl.BlockSpec(memory_space=pltpu.MemorySpace.VMEM),
                pl.BlockSpec(memory_space=pltpu.MemorySpace.VMEM),
            ],
            out_specs=pl.BlockSpec(memory_space=pltpu.MemorySpace.VMEM),
            cost_estimate=_cost(B, IN, OUT),
        )(x, w, b2)

    # Large-batch path: tile the batch axis, keep IN/OUT full (they equal the
    # array dims so the (8,128) constraint is satisfied).  grid = cdiv(B, tb):
    # Pallas masks the ragged trailing block, so no divisor search / padding
    # is needed.  Per-tile padded VMEM at tb=4096 is ~2 MiB in + ~2 MiB out,
    # double-buffered ~8 MiB — under the 16 MiB v5e scoped default and the
    # 32 MiB v6e/v7x defaults.  "parallel" lets dual-TC parts split the steps.
    tb = _pick_batch_tile(B, block_b)
    grid = (pl.cdiv(B, tb),)
    return pl.pallas_call(
        _linear_clamp_kernel,
        out_shape=out_shape,
        grid=grid,
        in_specs=[
            pl.BlockSpec((tb, IN), lambda i: (i, 0)),
            pl.BlockSpec((IN, OUT), lambda i: (0, 0)),
            pl.BlockSpec((1, OUT), lambda i: (0, 0)),
        ],
        out_specs=pl.BlockSpec((tb, OUT), lambda i: (i, 0)),
        compiler_params=pltpu.CompilerParams(
            dimension_semantics=("parallel",),
        ),
        cost_estimate=_cost(B, IN, OUT),
    )(x, w, b2)


if __name__ == "__main__":
    key = jax.random.PRNGKey(0)
    k_x, k_w, k_b, k_x2 = jax.random.split(key, 4)

    B, IN, OUT = 8, 20, 10
    x3 = jax.random.normal(k_x, (B, IN), dtype=jnp.float32)

    # Deterministic parameter init mimicking nn.Linear(20, 10) default
    # (uniform in [-1/sqrt(IN), 1/sqrt(IN)]).
    bound = 1.0 / (IN ** 0.5)
    w = jax.random.uniform(k_w, (IN, OUT), minval=-bound, maxval=bound,
                           dtype=jnp.float32)
    b = jax.random.uniform(k_b, (OUT,), minval=-bound, maxval=bound,
                           dtype=jnp.float32)

    def ref_fn(xv):
        return jnp.minimum(jnp.maximum(xv @ w + b, 0.0), 2.0)

    # Small-batch (gridless) path — matches the module's nominal usage.
    out = jax.block_until_ready(linear_clamp(x3, w, b))
    assert out.shape == (B, OUT)
    assert jnp.allclose(out, ref_fn(x3), atol=1e-5, rtol=1e-5)

    # Batch-tiled ("parallel" grid) path, with a ragged trailing block
    # (B_big = 4104 is not a multiple of the chosen tile) to exercise the
    # cdiv/masked-tail handling.
    B_big = 4104
    x_big = jax.random.normal(k_x2, (B_big, IN), dtype=jnp.float32)
    out_big = jax.block_until_ready(linear_clamp(x_big, w, b))
    assert out_big.shape == (B_big, OUT)
    assert jnp.allclose(out_big, ref_fn(x_big), atol=1e-5, rtol=1e-5)

    print("KERNEL_OK")
</pallas_src>

<mosaic_0001>
module attributes {stable_mosaic.version = 11 : i64} {
  func.func @_linear_clamp_kernel(%arg0: memref<8x20xf32, #tpu.memory_space<vmem>>, %arg1: memref<20x10xf32, #tpu.memory_space<vmem>>, %arg2: memref<1x10xf32, #tpu.memory_space<vmem>>, %arg3: memref<8x10xf32, #tpu.memory_space<vmem>>) attributes {dimension_semantics = [], scalar_prefetch = 0 : i64, scratch_operands = 0 : i64, tpu.core_type = #tpu.core_type<tc>} {
    %c0 = arith.constant 0 : index
    %c0_0 = arith.constant 0 : index
    %0 = vector.load %arg0[%c0, %c0_0] : memref<8x20xf32, #tpu.memory_space<vmem>>, vector<8x20xf32>
    %c0_1 = arith.constant 0 : index
    %c0_2 = arith.constant 0 : index
    %1 = vector.load %arg1[%c0_1, %c0_2] : memref<20x10xf32, #tpu.memory_space<vmem>>, vector<20x10xf32>
    %cst = arith.constant dense<0.000000e+00> : vector<8x10xf32>
    %2 = tpu.matmul %0, %1, %cst {dimension_numbers = #tpu.dot_dimension_numbers<[1], [0], [0], [1], [0, 0, 1, 1], [], []>} : vector<8x20xf32>, vector<20x10xf32>, vector<8x10xf32> -> vector<8x10xf32>
    %c0_3 = arith.constant 0 : index
    %c0_4 = arith.constant 0 : index
    %3 = vector.load %arg2[%c0_3, %c0_4] : memref<1x10xf32, #tpu.memory_space<vmem>>, vector<1x10xf32>
    %4 = vector.broadcast %3 : vector<1x10xf32> to vector<8x10xf32>
    %5 = arith.addf %2, %4 : vector<8x10xf32>
    %cst_5 = arith.constant 0.000000e+00 : f32
    %cst_6 = arith.constant 2.000000e+00 : f32
    %6 = vector.broadcast %cst_5 : f32 to vector<8x10xf32>
    %7 = arith.maximumf %6, %5 : vector<8x10xf32>
    %8 = vector.broadcast %cst_6 : f32 to vector<8x10xf32>
    %9 = arith.minimumf %8, %7 : vector<8x10xf32>
    %c0_7 = arith.constant 0 : index
    %c0_8 = arith.constant 0 : index
    %10 = vector.load %arg3[%c0_7, %c0_8] : memref<8x10xf32, #tpu.memory_space<vmem>>, vector<8x10xf32>
    tpu.vector_store %arg3[%c0_7, %c0_8], %9 {strides = array<i32>} : memref<8x10xf32, #tpu.memory_space<vmem>>, vector<8x10xf32>,
    return
  }
}

</mosaic_0001>

<llo_original>
// kernel: linear_clamp.1
$region0: #{linear_clamp.1}
  #allocation0 [shape = 'u32[]', space=smem, size = 0x4, offset = 0x4, fixed_abs, tag = 'smem constant byte address 0x4 - core index']
  #allocation1 [shape = 'u32[144,128]{1,0:T(1,128)}', space=vmem, size = 0x12000, scoped, tag = 'internal scratch']
  %s0 = inlined_call_operand.vmem [shape: f32[8,20], index: 0, kind: input, shape index: {}]
  %s1 = inlined_call_operand.vmem [shape: f32[20,10], index: 1, kind: input, shape index: {}]
  %s2 = inlined_call_operand.vmem [shape: f32[1,10], index: 2, kind: input, shape index: {}]
  %s3 = inlined_call_operand.hbm [shape: f32[8,10], index: 3, kind: output, shape index: {}]
  %s4 = sld [smem:[#allocation0]]
  $region22: #{linear_clamp.1} parent=0
    _
  %s6 = ssub.s32 1, %s4
  %s7 = scalar_select 0, %s6, %s4
  $region1: #{linear_clamp.1} parent=0
    #allocation2 [shape = 'u8[4096]{0}', space=vmem, size = 0x1000, scoped, tag = 'output window, operand 0, single buffered']
    #allocation3 [shape = 's32[1]{0}', space=sflag, size = 0x4, scoped, tag = 'scoped memory for linear_clamp.1']
    %8 = vsyncpa [#allocation3], 0
    // Predicated region
    $region2: #{linear_clamp.1} parent=1 // pred_check
      _
    $region3: #{linear_clamp.1} parent=1 // pred_check_branch
      %10 = sbr.rel (0) target = $region5
    $region4: #{linear_clamp.1} parent=1 // pred_region
      _
    $region5: #{linear_clamp.1} parent=1 // pred_fallthru
      _
    // Predicated region
    $region6: #{linear_clamp.1} parent=1 // pred_check
      _
    $region7: #{linear_clamp.1} parent=1 // pred_check_branch
      %12 = sbr.rel (0) target = $region9
    $region8: #{linear_clamp.1} parent=1 // pred_region
      _
    $region9: #{linear_clamp.1} parent=1 // pred_fallthru
      _
    // Predicated region
    $region10: #{linear_clamp.1} parent=1 // pred_check
      _
    $region11: #{linear_clamp.1} parent=1 // pred_check_branch
      %14 = sbr.rel (0) target = $region13
    $region12: #{linear_clamp.1} parent=1 // pred_region
      _
    $region13: #{linear_clamp.1} parent=1 // pred_fallthru
      _
    %v15 = vld [vmem:[%s0] sm:$0xff]
    %v16 = vld [vmem:[%s1] sm:$0xff]
    %v17 = vld [vmem:[%s1 + $0x8] sm:$0xff]
    %v18 = vld [vmem:[%s1 + $0x10] sm:$0xf]
    %v19 = vld [vmem:[%s2] sm:$0x1]
    %v21 = vlaneseq
    %v22 = vshrl.u32 %v21, 7
    %v23 = vsub.s32 0, %v22
    %v24 = vrot.slane %v19, %v23
    %vm26 = vcmask 162816
    %v28 = vsel %vm26, %v15, 0
    %vm30 = vcmask 1043456
    %v32 = vsel %vm30, %v18, 0
    %34 = vmatprep.subr.mxu0 0.0
    %35 = vmatpush1.msra.mxu0 0.0
    %36 = vmatprep.subr.mxu0 0.0
    %37 = vmatpush1.msra.mxu0 0.0
    %38 = vmatprep.subr.mxu0 0.0
    %39 = vmatpush1.msra.mxu0 0.0
    %40 = vmatprep.subr.mxu0 0.0
    %41 = vmatpush1.msra.mxu0 0.0
    %42 = vmatprep.subr.mxu0 0.0
    %43 = vmatpush1.msra.mxu0 0.0
    %44 = vmatprep.subr.mxu0 0.0
    %45 = vmatpush1.msra.mxu0 0.0
    %46 = vmatprep.subr.mxu0 0.0
    %47 = vmatpush1.msra.mxu0 0.0
    %48 = vmatprep.subr.mxu0 0.0
    %49 = vmatpush1.msra.mxu0 0.0
    %50 = vmatprep.subr.mxu0 0.0
    %51 = vmatpush1.msra.mxu0 0.0
    %52 = vmatprep.subr.mxu0 0.0
    %53 = vmatpush1.msra.mxu0 0.0
    %54 = vmatprep.subr.mxu0 0.0
    %55 = vmatpush1.msra.mxu0 0.0
    %56 = vmatprep.subr.mxu0 0.0
    %57 = vmatpush1.msra.mxu0 0.0
    %58 = vmatprep.subr.mxu0 0.0
    %59 = vmatpush1.msra.mxu0 0.0
    %60 = vmatprep.subr.mxu0 0.0
    %61 = vmatpush1.msra.mxu0 %v32
    %62 = vmatprep.subr.mxu0 0.0
    %63 = vmatpush1.msra.mxu0 %v17
    %64 = vmatprep.subr.mxu0 0.0
    %65 = vmatpush1.msra.mxu0 %v16
    %66 = vmatprep.subr.mxu0 0.0
    %67 = vmatpush2.msra.mxu0 0.0
    %68 = vmatprep.subr.mxu0 0.0
    %69 = vmatpush2.msra.mxu0 0.0
    %70 = vmatprep.subr.mxu0 0.0
    %71 = vmatpush2.msra.mxu0 0.0
    %72 = vmatprep.subr.mxu0 0.0
    %73 = vmatpush2.msra.mxu0 0.0
    %74 = vmatprep.subr.mxu0 0.0
    %75 = vmatpush2.msra.mxu0 0.0
    %76 = vmatprep.subr.mxu0 0.0
    %77 = vmatpush2.msra.mxu0 0.0
    %78 = vmatprep.subr.mxu0 0.0
    %79 = vmatpush2.msra.mxu0 0.0
    %80 = vmatprep.subr.mxu0 0.0
    %81 = vmatpush2.msra.mxu0 0.0
    %82 = vmatprep.subr.mxu0 0.0
    %83 = vmatpush2.msra.mxu0 0.0
    %84 = vmatprep.subr.mxu0 0.0
    %85 = vmatpush2.msra.mxu0 0.0
    %86 = vmatprep.subr.mxu0 0.0
    %87 = vmatpush2.msra.mxu0 0.0
    %88 = vmatprep.subr.mxu0 0.0
    %89 = vmatpush2.msra.mxu0 0.0
    %90 = vmatprep.subr.mxu0 0.0
    %91 = vmatpush2.msra.mxu0 0.0
    %92 = vmatprep.subr.mxu0 0.0
    %93 = vmatpush2.msra.mxu0 0.0
    %94 = vmatprep.subr.mxu0 0.0
    %95 = vmatpush2.msra.mxu0 0.0
    %96 = vmatprep.subr.mxu0 0.0
    %97 = vmatpush2.msra.mxu0 0.0
    %98 = vmatprep.mubr.f32.mxu0 0.0
    %99 = vmatmul.mubr.f32.gmra.mxu0 %v28
    %v100 = vpop.f32.mrf.mxu0
    %v101 = vadd.f32 %v24, %v100
    %v102 = vpop.f32.mrf.mxu0
    %103 = vdwg.mxu0
    %v104 = vmax.f32 %v101, 0.0
    %v105 = vmin.f32 %v104, 2.0
    %vm106 = vcmask 80896
    %107 = vst.msk [vmem:[#allocation2] sm:$0xff] %vm106, %v105
    // Predicated region
    $region14: #{linear_clamp.1} parent=1 // pred_check
      _
    $region15: #{linear_clamp.1} parent=1 // pred_check_branch
      %109 = sbr.rel (0) target = $region17
    $region16: #{linear_clamp.1} parent=1 // pred_region
      %s111 = ssub.s32 128, 128
      %112 = vsyncadd [#allocation3], %s111
      %s114 = sshll.u32 [#allocation2], 4
      %s115 = int_to_ptr.vmem [resolvable:$true] %s114
      %117 = dma.vmem_to_hbm [thread:$0]  %s115, 128, %s3, [#allocation3]
    $region17: #{linear_clamp.1} parent=1 // pred_fallthru
      _
    // Predicated region
    $region18: #{linear_clamp.1} parent=1 // pred_check
      _
    $region19: #{linear_clamp.1} parent=1 // pred_check_branch
      %119 = sbr.rel (0) target = $region21
    $region20: #{linear_clamp.1} parent=1 // pred_region
      %120 = dma.done [#allocation3], 128
    $region21: #{linear_clamp.1} parent=1 // pred_fallthru
      _
    %121 = vsyncpa [#allocation3], 1

</llo_original>
